<compile_context>
chip_gen: v7x
topology: tpu7x:2x2x1
jax: 0.10.0
libtpu: 0.0.40
codegen_flags: <defaults>
</compile_context>

<pallas_src>
import jax
import jax.numpy as jnp
from jax.experimental import pallas as pl
from jax.experimental.pallas import tpu as pltpu


def _patch_proj_kernel(p_ref, w_ref, b_ref, o_ref):
    # p_ref: (tm, K_pad) bf16 patch rows, w_ref: (K_pad, tn) bf16 projection,
    # b_ref: (1, tn) f32 bias, o_ref: (tm, tn) output.
    acc = jnp.dot(p_ref[...], w_ref[...], preferred_element_type=jnp.float32)
    o_ref[...] = (acc + b_ref[...]).astype(o_ref.dtype)


def _round_up(x, m):
    return (x + m - 1) // m * m


def _vmem_capacity_bytes():
    try:
        return int(pltpu.get_tpu_info().vmem_capacity_bytes)
    except Exception:
        return 64 * 1024 * 1024  # v7x floor as a conservative fallback


def _pick_tiles(M, K_pad, N_pad, in_itemsize, out_itemsize):
    """Pick (tm, tn): weight resident along N if it fits, big streaming M tiles."""
    budget = _vmem_capacity_bytes() // 3          # leave scoped headroom

    # N tile: keep the whole weight resident unless it blows the budget.
    tn = N_pad
    while K_pad * tn * in_itemsize > budget // 3 and tn > 512:
        tn //= 2
    tn = min(max(_round_up(tn, 128), 128), N_pad)

    weight_bytes = K_pad * tn * in_itemsize
    avail = max(budget - 2 * weight_bytes - 8 * N_pad, 1)
    per_row = 2 * (K_pad * in_itemsize + tn * out_itemsize)   # dbl-buffered in+out
    tm_fit = max(avail // per_row, 16)

    if M <= 256:
        # Tiny problem: one tile covering all rows (bf16 sublane-packing aligned).
        tm = max(_round_up(M, 16), 16)
    else:
        tm_target = min(max((tm_fit // 16) * 16, 256), 1024)
        n_tiles = pl.cdiv(M, tm_target)
        if M >= 512:
            n_tiles = max(n_tiles, 2)             # two tiles for v7x's two TCs
        tm = _round_up(pl.cdiv(M, n_tiles), 16)
    return tm, tn


def prepare_patcher_params(weight, bias, compute_dtype=jnp.bfloat16):
    """One-time conversion of Conv2d (n_embd, C, p, p) weights to (K, N) layout."""
    n_embd, C, p, _ = weight.shape
    K = C * p * p
    w_mat = weight.reshape(n_embd, K).T.astype(compute_dtype)   # (K, N)
    b_mat = bias.astype(jnp.float32).reshape(1, n_embd)         # (1, N) f32
    return w_mat, b_mat


def patcher_forward(x, w_mat, b_mat, patch):
    """Equivalent of Patcher.forward.

    x:     (B, C, H, W)  NCHW, like PyTorch
    w_mat: (K, n_embd)   prepared projection (K = C*patch*patch), bf16
    b_mat: (1, n_embd)   f32 bias
    returns (B, Np, n_embd) with Np = (H//patch)*(W//patch)
    """
    B, C, H, W = x.shape
    p = patch
    Hp, Wp = H // p, W // p
    Np = Hp * Wp
    K, N = w_mat.shape
    assert K == C * p * p

    out_dtype = x.dtype
    compute_dtype = w_mat.dtype
    in_itemsize = jnp.dtype(compute_dtype).itemsize
    out_itemsize = jnp.dtype(out_dtype).itemsize

    # --- glue: extract non-overlapping patches (one fused XLA transpose pass,
    # done in bf16 to halve the HBM round-trip of the rearrangement) ---
    # (B, C, Hp, p, Wp, p) -> (B, Hp, Wp, C, p, p) -> (B*Np, C*p*p)
    patches = x.astype(compute_dtype).reshape(B, C, Hp, p, Wp, p)
    patches = patches.transpose(0, 2, 4, 1, 3, 5).reshape(B * Np, K)

    M = B * Np

    # Lane-dense padding of contraction / output axes (zeros are exact no-ops).
    K_pad = _round_up(K, 128)
    N_pad = _round_up(N, 128)
    if K_pad != K:
        patches = jnp.pad(patches, ((0, 0), (0, K_pad - K)))
        w_mat = jnp.pad(w_mat, ((0, K_pad - K), (0, 0)))
    if N_pad != N:
        w_mat = jnp.pad(w_mat, ((0, 0), (0, N_pad - N)))
        b_mat = jnp.pad(b_mat, ((0, 0), (0, N_pad - N)))

    tm, tn = _pick_tiles(M, K_pad, N_pad, in_itemsize, out_itemsize)
    M_pad = _round_up(M, tm)
    if M_pad != M:
        patches = jnp.pad(patches, ((0, M_pad - M), (0, 0)))

    grid_m = M_pad // tm
    grid_n = N_pad // tn

    # Explicit VMEM limit with headroom (v7x has only 64 MiB physical VMEM).
    weight_tile_bytes = K_pad * tn * in_itemsize
    vmem_needed = (2 * tm * (K_pad * in_itemsize + tn * out_itemsize)
                   + 2 * (weight_tile_bytes + 4 * tn) + (1 << 20))
    vmem_limit = int(min(_vmem_capacity_bytes() // 2,
                         max(vmem_needed, 16 << 20)))

    cost = pl.CostEstimate(
        flops=2 * M_pad * N_pad * K_pad,
        transcendentals=0,
        bytes_accessed=int(M_pad * K_pad * in_itemsize
                           + K_pad * N_pad * in_itemsize
                           + 4 * N_pad
                           + M_pad * N_pad * out_itemsize),
    )

    out = pl.pallas_call(
        _patch_proj_kernel,
        out_shape=jax.ShapeDtypeStruct((M_pad, N_pad), out_dtype),
        grid_spec=pltpu.PrefetchScalarGridSpec(
            num_scalar_prefetch=0,
            grid=(grid_m, grid_n),
            in_specs=[
                pl.BlockSpec((tm, K_pad), lambda i, j: (i, 0)),   # streamed rows
                pl.BlockSpec((K_pad, tn), lambda i, j: (0, j)),   # resident weight
                pl.BlockSpec((1, tn), lambda i, j: (0, j)),       # resident bias
            ],
            out_specs=pl.BlockSpec((tm, tn), lambda i, j: (i, j)),
        ),
        compiler_params=pltpu.CompilerParams(
            dimension_semantics=("parallel", "parallel"),
            vmem_limit_bytes=vmem_limit,
        ),
        cost_estimate=cost,
    )(patches, w_mat, b_mat)

    if N_pad != N:
        out = out[:, :N]
    return out[:M].reshape(B, Np, N)


if __name__ == "__main__":
    # Small, module-consistent shapes.
    B, C, H, W = 2, 4, 16, 16
    patch = 8
    n_embd = 128

    key = jax.random.PRNGKey(0)
    kx, kw, kb = jax.random.split(key, 3)
    x = jax.random.normal(kx, (B, C, H, W), dtype=jnp.float32)
    # Deterministic synthetic parameters (Conv2d weight/bias shapes).
    weight = jax.random.normal(kw, (n_embd, C, patch, patch), dtype=jnp.float32) * 0.02
    bias = jax.random.normal(kb, (n_embd,), dtype=jnp.float32) * 0.01

    # One-time weight preparation (hoisted out of the per-call path).
    w_mat, b_mat = prepare_patcher_params(weight, bias)

    out = patcher_forward(x, w_mat, b_mat, patch)
    out = jax.block_until_ready(out)

    # Pure-JAX reference: conv2d (stride = kernel = patch) then flatten+transpose.
    ref = jax.lax.conv_general_dilated(
        x, weight, window_strides=(patch, patch), padding="VALID",
        dimension_numbers=("NCHW", "OIHW", "NCHW"))
    ref = ref + bias.reshape(1, n_embd, 1, 1)
    ref = ref.reshape(B, n_embd, -1).transpose(0, 2, 1)

    assert out.shape == (B, (H // patch) * (W // patch), n_embd), out.shape
    # bf16 inputs with f32 accumulation -> ~1e-2 tolerance for this projection.
    assert jnp.allclose(out, ref, atol=2e-2, rtol=2e-2), \
        float(jnp.max(jnp.abs(out - ref)))
    print("KERNEL_OK")
</pallas_src>

<mosaic_0001>
module attributes {stable_mosaic.version = 11 : i64} {
  func.func @_patch_proj_kernel(%arg0: i32, %arg1: i32, %arg2: memref<16x256xbf16, #tpu.memory_space<vmem>>, %arg3: memref<256x128xbf16, #tpu.memory_space<vmem>>, %arg4: memref<1x128xf32, #tpu.memory_space<vmem>>, %arg5: memref<16x128xf32, #tpu.memory_space<vmem>>) attributes {dimension_semantics = [#tpu.dimension_semantics<parallel>, #tpu.dimension_semantics<parallel>], iteration_bounds = array<i64: 1, 1>, scalar_prefetch = 0 : i64, scratch_operands = 0 : i64, tpu.core_type = #tpu.core_type<tc>, window_params = [{transform_indices = @transform_0, window_bounds = array<i64: 16, 256>}, {transform_indices = @transform_1, window_bounds = array<i64: 256, 128>}, {transform_indices = @transform_2, window_bounds = array<i64: 1, 128>}, {transform_indices = @transform_3, window_bounds = array<i64: 16, 128>}]} {
    %c0 = arith.constant 0 : index
    %c0_0 = arith.constant 0 : index
    %0 = vector.load %arg2[%c0, %c0_0] : memref<16x256xbf16, #tpu.memory_space<vmem>>, vector<16x256xbf16>
    %c0_1 = arith.constant 0 : index
    %c0_2 = arith.constant 0 : index
    %1 = vector.load %arg3[%c0_1, %c0_2] : memref<256x128xbf16, #tpu.memory_space<vmem>>, vector<256x128xbf16>
    %cst = arith.constant dense<0.000000e+00> : vector<16x128xf32>
    %2 = tpu.matmul %0, %1, %cst {dimension_numbers = #tpu.dot_dimension_numbers<[1], [0], [0], [1], [0, 0, 1, 1], [], []>} : vector<16x256xbf16>, vector<256x128xbf16>, vector<16x128xf32> -> vector<16x128xf32>
    %c0_3 = arith.constant 0 : index
    %c0_4 = arith.constant 0 : index
    %3 = vector.load %arg4[%c0_3, %c0_4] : memref<1x128xf32, #tpu.memory_space<vmem>>, vector<1x128xf32>
    %4 = vector.broadcast %3 : vector<1x128xf32> to vector<16x128xf32>
    %5 = arith.addf %2, %4 : vector<16x128xf32>
    %c0_5 = arith.constant 0 : index
    %c0_6 = arith.constant 0 : index
    %6 = vector.load %arg5[%c0_5, %c0_6] : memref<16x128xf32, #tpu.memory_space<vmem>>, vector<16x128xf32>
    tpu.vector_store %arg5[%c0_5, %c0_6], %5 {strides = array<i32>} : memref<16x128xf32, #tpu.memory_space<vmem>>, vector<16x128xf32>,
    return
  }
  func.func @transform_0(%arg0: i32, %arg1: i32) -> (i32, i32) {
    %c0_i32 = arith.constant 0 : i32
    %c0_i32_0 = arith.constant 0 : i32
    return %arg0, %c0_i32 : i32, i32
  }
  func.func @transform_1(%arg0: i32, %arg1: i32) -> (i32, i32) {
    %c0_i32 = arith.constant 0 : i32
    %c0_i32_0 = arith.constant 0 : i32
    return %c0_i32, %arg1 : i32, i32
  }
  func.func @transform_2(%arg0: i32, %arg1: i32) -> (i32, i32) {
    %c0_i32 = arith.constant 0 : i32
    %c0_i32_0 = arith.constant 0 : i32
    return %c0_i32, %arg1 : i32, i32
  }
  func.func @transform_3(%arg0: i32, %arg1: i32) -> (i32, i32) {
    %c0_i32 = arith.constant 0 : i32
    return %arg0, %arg1 : i32, i32
  }
}

</mosaic_0001>

<llo_original>
// kernel: tpu_custom_call.1
$region0: #{tpu_custom_call.1}
  #allocation0 [shape = 'u32[]', space=smem, size = 0x4, offset = 0x4, fixed_abs, tag = 'smem constant byte address 0x4 - core index']
  #allocation1 [shape = 'u32[144,128]{1,0:T(1,128)}', space=vmem, size = 0x12000, scoped, tag = 'internal scratch']
  %s0 = inlined_call_operand.hbm [shape: bf16[16,256], index: 0, kind: input, shape index: {}]
  %s1 = inlined_call_operand.hbm [shape: bf16[256,128], index: 1, kind: input, shape index: {}]
  %s2 = inlined_call_operand.vmem [shape: f32[1,128], index: 2, kind: input, shape index: {}]
  %s3 = inlined_call_operand.hbm [shape: f32[16,128], index: 3, kind: output, shape index: {}]
  %s4 = sld [smem:[#allocation0]]
  $region30: #{tpu_custom_call.1} parent=0
    _
  %s6 = ssub.s32 1, %s4
  %s7 = scalar_select 0, %s6, %s4
  $region1: #{tpu_custom_call.1} parent=0
    #allocation2 [shape = 'u8[8192]{0}', space=vmem, size = 0x2000, scoped, tag = 'input window, operand 0, single buffered']
    #allocation3 [shape = 's32[1]{0}', space=sflag, size = 0x4, scoped, tag = 'scoped memory for tpu_custom_call.1']
    #allocation4 [shape = 's32[1]{0}', space=sflag, size = 0x4, scoped, tag = 'scoped memory for tpu_custom_call.1']
    #allocation5 [shape = 'u8[65536]{0}', space=vmem, size = 0x10000, scoped, tag = 'input window, operand 1, single buffered']
    #allocation6 [shape = 's32[1]{0}', space=sflag, size = 0x4, scoped, tag = 'scoped memory for tpu_custom_call.1']
    #allocation7 [shape = 'u8[8192]{0}', space=vmem, size = 0x2000, scoped, tag = 'output window, operand 0, single buffered']
    %8 = vsyncpa [#allocation3], 0
    %9 = vsyncpa [#allocation6], 0
    %10 = vsyncpa [#allocation4], 0
    // Predicated region
    $region2: #{tpu_custom_call.1} parent=1 // pred_check
      _
    $region3: #{tpu_custom_call.1} parent=1 // pred_check_branch
      %12 = sbr.rel (0) target = $region5
    $region4: #{tpu_custom_call.1} parent=1 // pred_region
      %s14 = ssub.s32 256, 256
      %15 = vsyncadd [#allocation3], %s14
      %s16 = sshll.u32 [#allocation2], 4
      %s17 = int_to_ptr.vmem [resolvable:$true] %s16
      %22 = dma.hbm_to_vmem [thread:$0]  %s0, 256, %s17, [#allocation3], 128, 128, 8
    $region5: #{tpu_custom_call.1} parent=1 // pred_fallthru
      _
    // Predicated region
    $region6: #{tpu_custom_call.1} parent=1 // pred_check
      _
    $region7: #{tpu_custom_call.1} parent=1 // pred_check_branch
      %24 = sbr.rel (0) target = $region9
    $region8: #{tpu_custom_call.1} parent=1 // pred_region
      %s26 = ssub.s32 2048, 2048
      %27 = vsyncadd [#allocation6], %s26
      %s28 = sshll.u32 [#allocation5], 4
      %s29 = int_to_ptr.vmem [resolvable:$true] %s28
      %34 = dma.hbm_to_vmem [thread:$0]  %s1, 2048, %s29, [#allocation6], 64, 64, 4
    $region9: #{tpu_custom_call.1} parent=1 // pred_fallthru
      _
    // Predicated region
    $region10: #{tpu_custom_call.1} parent=1 // pred_check
      _
    $region11: #{tpu_custom_call.1} parent=1 // pred_check_branch
      %36 = sbr.rel (0) target = $region13
    $region12: #{tpu_custom_call.1} parent=1 // pred_region
      _
    $region13: #{tpu_custom_call.1} parent=1 // pred_fallthru
      _
    // Predicated region
    $region14: #{tpu_custom_call.1} parent=1 // pred_check
      _
    $region15: #{tpu_custom_call.1} parent=1 // pred_check_branch
      %38 = sbr.rel (0) target = $region17
    $region16: #{tpu_custom_call.1} parent=1 // pred_region
      %39 = dma.done [#allocation3], 256
    $region17: #{tpu_custom_call.1} parent=1 // pred_fallthru
      _
    // Predicated region
    $region18: #{tpu_custom_call.1} parent=1 // pred_check
      _
    $region19: #{tpu_custom_call.1} parent=1 // pred_check_branch
      %41 = sbr.rel (0) target = $region21
    $region20: #{tpu_custom_call.1} parent=1 // pred_region
      %42 = dma.done [#allocation6], 2048
    $region21: #{tpu_custom_call.1} parent=1 // pred_fallthru
      _
    %v44 = vld [vmem:[#allocation2] sm:$0xff]
    %v45 = vld [vmem:[#allocation2 + $0x8] sm:$0xff]
    %v46 = vld [vmem:[#allocation5] sm:$0xf]
    %v47 = vld [vmem:[#allocation5 + $0x4] sm:$0xf]
    %v48 = vld [vmem:[#allocation5 + $0x8] sm:$0xf]
    %v49 = vld [vmem:[#allocation5 + $0xc] sm:$0xf]
    %v50 = vld [vmem:[#allocation5 + $0x10] sm:$0xf]
    %v51 = vld [vmem:[#allocation5 + $0x14] sm:$0xf]
    %v52 = vld [vmem:[#allocation5 + $0x18] sm:$0xf]
    %v53 = vld [vmem:[#allocation5 + $0x1c] sm:$0xf]
    %v54 = vld [vmem:[#allocation5 + $0x20] sm:$0xf]
    %v55 = vld [vmem:[#allocation5 + $0x24] sm:$0xf]
    %v56 = vld [vmem:[#allocation5 + $0x28] sm:$0xf]
    %v57 = vld [vmem:[#allocation5 + $0x2c] sm:$0xf]
    %v58 = vld [vmem:[#allocation5 + $0x30] sm:$0xf]
    %v59 = vld [vmem:[#allocation5 + $0x34] sm:$0xf]
    %v60 = vld [vmem:[#allocation5 + $0x38] sm:$0xf]
    %v61 = vld [vmem:[#allocation5 + $0x3c] sm:$0xf]
    %v62 = vld [vmem:[#allocation5 + $0x40] sm:$0xf]
    %v63 = vld [vmem:[#allocation5 + $0x44] sm:$0xf]
    %v64 = vld [vmem:[#allocation5 + $0x48] sm:$0xf]
    %v65 = vld [vmem:[#allocation5 + $0x4c] sm:$0xf]
    %v66 = vld [vmem:[#allocation5 + $0x50] sm:$0xf]
    %v67 = vld [vmem:[#allocation5 + $0x54] sm:$0xf]
    %v68 = vld [vmem:[#allocation5 + $0x58] sm:$0xf]
    %v69 = vld [vmem:[#allocation5 + $0x5c] sm:$0xf]
    %v70 = vld [vmem:[#allocation5 + $0x60] sm:$0xf]
    %v71 = vld [vmem:[#allocation5 + $0x64] sm:$0xf]
    %v72 = vld [vmem:[#allocation5 + $0x68] sm:$0xf]
    %v73 = vld [vmem:[#allocation5 + $0x6c] sm:$0xf]
    %v74 = vld [vmem:[#allocation5 + $0x70] sm:$0xf]
    %v75 = vld [vmem:[#allocation5 + $0x74] sm:$0xf]
    %v76 = vld [vmem:[#allocation5 + $0x78] sm:$0xf]
    %v77 = vld [vmem:[#allocation5 + $0x7c] sm:$0xf]
    %v78 = vld [vmem:[%s2] sm:$0x1]
    %v80 = vlaneseq
    %v81 = vshrl.u32 %v80, 7
    %v82 = vsub.s32 0, %v81
    %v83 = vrot.slane %v78, %v82
    %v87 = vunpack.c.l.b16 %v44
    %v88 = vunpack.c.h.b16 %v44
    %v89 = vunpack.c.l.b16 %v45
    %v90 = vunpack.c.h.b16 %v45
    %v91 = vpack.c.b16 %v89, %v87
    %v92 = vpack.c.b16 %v90, %v88
    %v127 = vunpack.c.l.b16 %v46
    %v128 = vunpack.c.l.b16 %v47
    %v129 = vunpack.c.l.b16 %v48
    %v130 = vunpack.c.l.b16 %v49
    %v131 = vunpack.c.l.b16 %v50
    %v132 = vunpack.c.l.b16 %v51
    %v133 = vunpack.c.l.b16 %v52
    %v134 = vunpack.c.l.b16 %v53
    %v135 = vunpack.c.l.b16 %v54
    %v136 = vunpack.c.l.b16 %v55
    %v137 = vunpack.c.l.b16 %v56
    %v138 = vunpack.c.l.b16 %v57
    %v139 = vunpack.c.l.b16 %v58
    %v140 = vunpack.c.l.b16 %v59
    %v141 = vunpack.c.l.b16 %v60
    %v142 = vunpack.c.l.b16 %v61
    %v143 = vunpack.c.l.b16 %v62
    %v144 = vunpack.c.l.b16 %v63
    %v145 = vunpack.c.l.b16 %v64
    %v146 = vunpack.c.l.b16 %v65
    %v147 = vunpack.c.l.b16 %v66
    %v148 = vunpack.c.l.b16 %v67
    %v149 = vunpack.c.l.b16 %v68
    %v150 = vunpack.c.l.b16 %v69
    %v151 = vunpack.c.l.b16 %v70
    %v152 = vunpack.c.l.b16 %v71
    %v153 = vunpack.c.l.b16 %v72
    %v154 = vunpack.c.l.b16 %v73
    %v155 = vunpack.c.l.b16 %v74
    %v156 = vunpack.c.l.b16 %v75
    %v157 = vunpack.c.l.b16 %v76
    %v158 = vunpack.c.l.b16 %v77
    %v159 = vpack.c.b16 %v128, %v127
    %v160 = vpack.c.b16 %v130, %v129
    %v161 = vpack.c.b16 %v132, %v131
    %v162 = vpack.c.b16 %v134, %v133
    %v163 = vpack.c.b16 %v136, %v135
    %v164 = vpack.c.b16 %v138, %v137
    %v165 = vpack.c.b16 %v140, %v139
    %v166 = vpack.c.b16 %v142, %v141
    %v167 = vpack.c.b16 %v144, %v143
    %v168 = vpack.c.b16 %v146, %v145
    %v169 = vpack.c.b16 %v148, %v147
    %v170 = vpack.c.b16 %v150, %v149
    %v171 = vpack.c.b16 %v152, %v151
    %v172 = vpack.c.b16 %v154, %v153
    %v173 = vpack.c.b16 %v156, %v155
    %v174 = vpack.c.b16 %v158, %v157
    %191 = vmatprep.subr.bf16.mxu0 0
    %192 = vmatpush1.bf16.msra.mxu0 %v159
    %193 = vmatprep.subr.bf16.mxu0 0
    %194 = vmatpush1.bf16.msra.mxu0 %v160
    %195 = vmatprep.subr.bf16.mxu0 0
    %196 = vmatpush1.bf16.msra.mxu0 %v161
    %197 = vmatprep.subr.bf16.mxu0 0
    %198 = vmatpush1.bf16.msra.mxu0 %v162
    %199 = vmatprep.subr.bf16.mxu0 0
    %200 = vmatpush1.bf16.msra.mxu0 %v163
    %201 = vmatprep.subr.bf16.mxu0 0
    %202 = vmatpush1.bf16.msra.mxu0 %v164
    %203 = vmatprep.subr.bf16.mxu0 0
    %204 = vmatpush1.bf16.msra.mxu0 %v165
    %205 = vmatprep.subr.bf16.mxu0 0
    %206 = vmatpush1.bf16.msra.mxu0 %v166
    %207 = vmatprep.subr.bf16.mxu0 0
    %208 = vmatpush1.bf16.msra.mxu0 %v167
    %209 = vmatprep.subr.bf16.mxu0 0
    %210 = vmatpush1.bf16.msra.mxu0 %v168
    %211 = vmatprep.subr.bf16.mxu0 0
    %212 = vmatpush1.bf16.msra.mxu0 %v169
    %213 = vmatprep.subr.bf16.mxu0 0
    %214 = vmatpush1.bf16.msra.mxu0 %v170
    %215 = vmatprep.subr.bf16.mxu0 0
    %216 = vmatpush1.bf16.msra.mxu0 %v171
    %217 = vmatprep.subr.bf16.mxu0 0
    %218 = vmatpush1.bf16.msra.mxu0 %v172
    %219 = vmatprep.subr.bf16.mxu0 0
    %220 = vmatpush1.bf16.msra.mxu0 %v173
    %221 = vmatprep.subr.bf16.mxu0 0
    %222 = vmatpush1.bf16.msra.mxu0 %v174
    %223 = vmatprep.mubr.bf16.mxu0 %v92
    %224 = vmatmul.mubr.bf16.gmra.mrb[0].mxu0 %v91
    %v225 = vpop.f32.mrb[0].mxu0
    %v226 = vadd.f32 %v83, %v225
    %v227 = vpop.f32.mrb[0].mxu0
    %v228 = vpop.f32.mrb[0].mxu0
    %v229 = vadd.f32 %v83, %v228
    %v230 = vpop.f32.mrb[0].mxu0
    %231 = vdwg.mxu0
    %232 = vst [vmem:[#allocation7] sm:$0xff] %v226
    %233 = vst [vmem:[#allocation7 + $0x8] sm:$0xff] %v229
    // Predicated region
    $region22: #{tpu_custom_call.1} parent=1 // pred_check
      _
    $region23: #{tpu_custom_call.1} parent=1 // pred_check_branch
      %235 = sbr.rel (0) target = $region25
    $region24: #{tpu_custom_call.1} parent=1 // pred_region
      %s237 = ssub.s32 256, 256
      %238 = vsyncadd [#allocation4], %s237
      %s239 = sshll.u32 [#allocation7], 4
      %s240 = int_to_ptr.vmem [resolvable:$true] %s239
      %245 = dma.vmem_to_hbm [thread:$0]  %s240, 256, %s3, [#allocation4], 128, 128, 8
    $region25: #{tpu_custom_call.1} parent=1 // pred_fallthru
      _
    // Predicated region
    $region26: #{tpu_custom_call.1} parent=1 // pred_check
      _
    $region27: #{tpu_custom_call.1} parent=1 // pred_check_branch
      %247 = sbr.rel (0) target = $region29
    $region28: #{tpu_custom_call.1} parent=1 // pred_region
      %248 = dma.done [#allocation4], 256
    $region29: #{tpu_custom_call.1} parent=1 // pred_fallthru
      _
    %249 = vsyncpa [#allocation3], 1
    %250 = vsyncpa [#allocation6], 1
    %251 = vsyncpa [#allocation4], 1

</llo_original>
